<compile_context>
chip_gen: v7x
topology: tpu7x:2x2x1
jax: 0.10.0
libtpu: 0.0.40
codegen_flags: <defaults>
</compile_context>

<pallas_src>
import jax
import jax.numpy as jnp
from jax.experimental import pallas as pl
from jax.experimental.pallas import tpu as pltpu


def _mlre_kernel(x_ref, p_ref,
                 w1_ref, b1_ref,
                 w2h_ref, w2p_ref, b2_ref,
                 w3_ref, b3_ref,
                 o_ref):
    # ---- head: Linear(D_in, HID) + ReLU ----
    # x arrives as f32 (single HBM pass); cast to bf16 on the VPU so the MXU
    # runs at full bf16 rate with f32 accumulation.
    x = x_ref[...].astype(jnp.bfloat16)                          # (TB, D_in)
    h = jnp.dot(x, w1_ref[...], preferred_element_type=jnp.float32)
    h = jnp.maximum(h + b1_ref[...], 0.0)                        # (TB, HID) f32

    # ---- combinator: concat(h, params) @ W2 + b2, ReLU (split-weight form) ----
    c = jnp.dot(h.astype(jnp.bfloat16), w2h_ref[...],
                preferred_element_type=jnp.float32)
    c = c + jnp.dot(p_ref[...], w2p_ref[...],                    # tiny K=P f32 dot
                    preferred_element_type=jnp.float32)
    c = jnp.maximum(c + b2_ref[...], 0.0)                        # (TB, HID) f32

    # ---- tail: Linear(HID, 1) as VPU multiply + lane reduction ----
    o_ref[...] = jnp.sum(c * w3_ref[...], axis=-1, keepdims=True) + b3_ref[0]


def _round_up(n, m):
    return ((n + m - 1) // m) * m


def _choose_block_b(batch, max_block_b=512):
    """Batch-tile height.

    batch <= 8: one exact tile (block dims equal to array dims are always legal).
    otherwise : aim for >= 2 tiles (v7x: two TensorCores share the grid via
                "parallel"), tile height a multiple of 8 sublanes, capped at
                512 rows (per-step overhead amortized; ~HBM roofline).
    """
    if batch <= 8:
        return batch
    half = _round_up(-(-batch // 2), 8)      # ceil(batch / 2), rounded up to 8
    return min(max_block_b, half)


def prepare_weights(weights):
    """One-time, kernel-ready weight layout. Call once; reuse across calls."""
    w1, b1, w2h, w2p, b2, w3, b3 = weights
    hid = w1.shape[1]
    return (
        w1.astype(jnp.bfloat16),                    # (D_in, HID)  MXU operand
        b1.astype(jnp.float32).reshape(1, hid),     # (1, HID)
        w2h.astype(jnp.bfloat16),                   # (HID, HID)   MXU operand
        w2p.astype(jnp.float32),                    # (P, HID)
        b2.astype(jnp.float32).reshape(1, hid),     # (1, HID)
        w3.astype(jnp.float32).reshape(1, hid),     # (1, HID)     row layout for VPU tail
        b3.astype(jnp.float32).reshape(1,),         # scalar -> SMEM
    )


def marginal_log_ratio_estimator(observation, parameters, prepared_weights, *,
                                 max_block_b=512):
    """observation: dict {"x": [B, C, H, W]}; parameters: [B, P] -> returns [B, 1]."""
    x = observation["x"]
    B = x.shape[0]
    # NCHW flatten == torch.flatten(x, 1); reshape of a contiguous array is a
    # view-like op — no extra HBM pass, no bf16-cast pass, no padding copy.
    x_flat = x.reshape(B, -1).astype(jnp.float32)
    params = parameters.astype(jnp.float32)

    w1_bf, b1_f, w2h_bf, w2p_f, b2_f, w3_row, b3_s = prepared_weights
    d_in, hid = w1_bf.shape
    p_dim = params.shape[1]

    block_b = _choose_block_b(B, max_block_b)
    n_tiles = pl.cdiv(B, block_b)               # ragged last tile handled by Pallas

    out = pl.pallas_call(
        _mlre_kernel,
        out_shape=jax.ShapeDtypeStruct((B, 1), jnp.float32),
        grid_spec=pltpu.PrefetchScalarGridSpec(
            num_scalar_prefetch=0,
            grid=(n_tiles,),
            in_specs=[
                # batch-tiled, auto-pipelined (double-buffered) inputs
                pl.BlockSpec((block_b, d_in), lambda i: (i, 0)),     # x tile (f32)
                pl.BlockSpec((block_b, p_dim), lambda i: (i, 0)),    # params tile (f32)
                # weights: same block every step -> loaded once, stay resident
                pl.BlockSpec((d_in, hid), lambda i: (0, 0)),         # W1 (bf16)
                pl.BlockSpec((1, hid), lambda i: (0, 0)),            # b1
                pl.BlockSpec((hid, hid), lambda i: (0, 0)),          # W2h (bf16)
                pl.BlockSpec((p_dim, hid), lambda i: (0, 0)),        # W2p
                pl.BlockSpec((1, hid), lambda i: (0, 0)),            # b2
                pl.BlockSpec((1, hid), lambda i: (0, 0)),            # W3 row
                pl.BlockSpec(memory_space=pltpu.SMEM),               # b3 scalar
            ],
            out_specs=pl.BlockSpec((block_b, 1), lambda i: (i, 0)),
        ),
        compiler_params=pltpu.CompilerParams(
            dimension_semantics=("parallel",),   # independent batch tiles (v7x: 2 TCs)
        ),
    )(x_flat, params, w1_bf, b1_f, w2h_bf, w2p_f, b2_f, w3_row, b3_s)

    return out


def _init_weights(key, d_in, p_dim, hid):
    ks = jax.random.split(key, 7)
    scale1 = 1.0 / jnp.sqrt(d_in)
    scale2 = 1.0 / jnp.sqrt(hid + p_dim)
    scale3 = 1.0 / jnp.sqrt(hid)
    w1 = jax.random.normal(ks[0], (d_in, hid), jnp.float32) * scale1
    b1 = jax.random.normal(ks[1], (1, hid), jnp.float32) * 0.01
    w2h = jax.random.normal(ks[2], (hid, hid), jnp.float32) * scale2
    w2p = jax.random.normal(ks[3], (p_dim, hid), jnp.float32) * scale2
    b2 = jax.random.normal(ks[4], (1, hid), jnp.float32) * 0.01
    w3 = jax.random.normal(ks[5], (hid, 1), jnp.float32) * scale3
    b3 = jax.random.normal(ks[6], (1, 1), jnp.float32) * 0.01
    return (w1, b1, w2h, w2p, b2, w3, b3)


def _reference(observation, parameters, weights):
    # Pure-JAX reference with the same bf16-operand / f32-accumulate math.
    # TODO(synk): pure-f32 MXU parity with the torch module would need f32 matmuls;
    # bf16 operands are validated here at 5e-3 tolerance.
    x = observation["x"]
    B = x.shape[0]
    x_flat = x.reshape(B, -1).astype(jnp.float32)
    w1, b1, w2h, w2p, b2, w3, b3 = weights
    h = jnp.dot(x_flat.astype(jnp.bfloat16), w1.astype(jnp.bfloat16),
                preferred_element_type=jnp.float32) + b1
    h = jnp.maximum(h, 0.0)
    c = (jnp.dot(h.astype(jnp.bfloat16), w2h.astype(jnp.bfloat16),
                 preferred_element_type=jnp.float32)
         + parameters.astype(jnp.float32) @ w2p + b2)
    c = jnp.maximum(c, 0.0)
    return c @ w3 + b3


if __name__ == "__main__":
    key = jax.random.PRNGKey(0)
    k_x, k_p, k_w, k_x2, k_p2 = jax.random.split(key, 5)

    B, C, H, W = 8, 4, 16, 16        # observation: NCHW
    P = 8                            # parameter dimension
    HID = 128                        # hidden width
    D_IN = C * H * W

    observation = {"x": jax.random.normal(k_x, (B, C, H, W), jnp.float32)}
    parameters = jax.random.normal(k_p, (B, P), jnp.float32)
    weights = _init_weights(k_w, D_IN, P, HID)

    # Weight prep runs once (hoisted out of the per-call path).
    prepared = jax.block_until_ready(prepare_weights(weights))

    out = jax.block_until_ready(
        marginal_log_ratio_estimator(observation, parameters, prepared))
    ref = _reference(observation, parameters, weights)
    assert out.shape == (B, 1)
    assert jnp.allclose(out, ref, atol=5e-3, rtol=5e-3)

    # Second call: large ragged batch spanning multiple 512-row tiles
    # (exercises the capped tile size, the partial last tile with no host-side
    # padding copy, and the resident-weight pipelined path).
    B2 = 1100
    obs2 = {"x": jax.random.normal(k_x2, (B2, C, H, W), jnp.float32)}
    par2 = jax.random.normal(k_p2, (B2, P), jnp.float32)
    out2 = jax.block_until_ready(
        marginal_log_ratio_estimator(obs2, par2, prepared))
    ref2 = _reference(obs2, par2, weights)
    assert out2.shape == (B2, 1)
    assert jnp.allclose(out2, ref2, atol=5e-3, rtol=5e-3)

    print("KERNEL_OK")
</pallas_src>

<mosaic_0001>
module attributes {stable_mosaic.version = 11 : i64} {
  func.func @_mlre_kernel(%arg0: i32, %arg1: memref<8x1024xf32, #tpu.memory_space<vmem>>, %arg2: memref<8x8xf32, #tpu.memory_space<vmem>>, %arg3: memref<1024x128xbf16, #tpu.memory_space<vmem>>, %arg4: memref<1x128xf32, #tpu.memory_space<vmem>>, %arg5: memref<128x128xbf16, #tpu.memory_space<vmem>>, %arg6: memref<8x128xf32, #tpu.memory_space<vmem>>, %arg7: memref<1x128xf32, #tpu.memory_space<vmem>>, %arg8: memref<1x128xf32, #tpu.memory_space<vmem>>, %arg9: memref<1xf32, #tpu.memory_space<smem>>, %arg10: memref<8x1xf32, #tpu.memory_space<vmem>>) attributes {dimension_semantics = [#tpu.dimension_semantics<parallel>], iteration_bounds = array<i64: 1>, scalar_prefetch = 0 : i64, scratch_operands = 0 : i64, tpu.core_type = #tpu.core_type<tc>, window_params = [{transform_indices = @transform_0, window_bounds = array<i64: 8, 1024>}, {transform_indices = @transform_1, window_bounds = array<i64: 8, 8>}, {pipeline_mode = #tpu.pipeline_mode<synchronous>, transform_indices = @transform_2, window_bounds = array<i64: 1024, 128>}, {pipeline_mode = #tpu.pipeline_mode<synchronous>, transform_indices = @transform_3, window_bounds = array<i64: 1, 128>}, {pipeline_mode = #tpu.pipeline_mode<synchronous>, transform_indices = @transform_4, window_bounds = array<i64: 128, 128>}, {pipeline_mode = #tpu.pipeline_mode<synchronous>, transform_indices = @transform_5, window_bounds = array<i64: 8, 128>}, {pipeline_mode = #tpu.pipeline_mode<synchronous>, transform_indices = @transform_6, window_bounds = array<i64: 1, 128>}, {pipeline_mode = #tpu.pipeline_mode<synchronous>, transform_indices = @transform_7, window_bounds = array<i64: 1, 128>}, {transform_indices = @transform_8, window_bounds = array<i64: 1>}, {transform_indices = @transform_9, window_bounds = array<i64: 8, 1>}]} {
    %c0 = arith.constant 0 : index
    %c0_0 = arith.constant 0 : index
    %0 = vector.load %arg1[%c0, %c0_0] : memref<8x1024xf32, #tpu.memory_space<vmem>>, vector<8x1024xf32>
    %1 = arith.truncf %0 : vector<8x1024xf32> to vector<8x1024xbf16>
    %c0_1 = arith.constant 0 : index
    %c0_2 = arith.constant 0 : index
    %2 = vector.load %arg3[%c0_1, %c0_2] : memref<1024x128xbf16, #tpu.memory_space<vmem>>, vector<1024x128xbf16>
    %cst = arith.constant dense<0.000000e+00> : vector<8x128xf32>
    %3 = tpu.matmul %1, %2, %cst {dimension_numbers = #tpu.dot_dimension_numbers<[1], [0], [0], [1], [0, 0, 1, 1], [], []>} : vector<8x1024xbf16>, vector<1024x128xbf16>, vector<8x128xf32> -> vector<8x128xf32>
    %c0_3 = arith.constant 0 : index
    %c0_4 = arith.constant 0 : index
    %4 = vector.load %arg4[%c0_3, %c0_4] : memref<1x128xf32, #tpu.memory_space<vmem>>, vector<1x128xf32>
    %5 = vector.broadcast %4 : vector<1x128xf32> to vector<8x128xf32>
    %6 = arith.addf %3, %5 : vector<8x128xf32>
    %cst_5 = arith.constant 0.000000e+00 : f32
    %7 = vector.broadcast %cst_5 : f32 to vector<8x128xf32>
    %8 = arith.maximumf %6, %7 : vector<8x128xf32>
    %9 = arith.truncf %8 : vector<8x128xf32> to vector<8x128xbf16>
    %c0_6 = arith.constant 0 : index
    %c0_7 = arith.constant 0 : index
    %10 = vector.load %arg5[%c0_6, %c0_7] : memref<128x128xbf16, #tpu.memory_space<vmem>>, vector<128x128xbf16>
    %cst_8 = arith.constant dense<0.000000e+00> : vector<8x128xf32>
    %11 = tpu.matmul %9, %10, %cst_8 {dimension_numbers = #tpu.dot_dimension_numbers<[1], [0], [0], [1], [0, 0, 1, 1], [], []>} : vector<8x128xbf16>, vector<128x128xbf16>, vector<8x128xf32> -> vector<8x128xf32>
    %c0_9 = arith.constant 0 : index
    %c0_10 = arith.constant 0 : index
    %12 = vector.load %arg2[%c0_9, %c0_10] : memref<8x8xf32, #tpu.memory_space<vmem>>, vector<8x8xf32>
    %c0_11 = arith.constant 0 : index
    %c0_12 = arith.constant 0 : index
    %13 = vector.load %arg6[%c0_11, %c0_12] : memref<8x128xf32, #tpu.memory_space<vmem>>, vector<8x128xf32>
    %cst_13 = arith.constant dense<0.000000e+00> : vector<8x128xf32>
    %14 = tpu.matmul %12, %13, %cst_13 {dimension_numbers = #tpu.dot_dimension_numbers<[1], [0], [0], [1], [0, 0, 1, 1], [], []>} : vector<8x8xf32>, vector<8x128xf32>, vector<8x128xf32> -> vector<8x128xf32>
    %15 = arith.addf %11, %14 : vector<8x128xf32>
    %c0_14 = arith.constant 0 : index
    %c0_15 = arith.constant 0 : index
    %16 = vector.load %arg7[%c0_14, %c0_15] : memref<1x128xf32, #tpu.memory_space<vmem>>, vector<1x128xf32>
    %17 = vector.broadcast %16 : vector<1x128xf32> to vector<8x128xf32>
    %18 = arith.addf %15, %17 : vector<8x128xf32>
    %cst_16 = arith.constant 0.000000e+00 : f32
    %19 = vector.broadcast %cst_16 : f32 to vector<8x128xf32>
    %20 = arith.maximumf %18, %19 : vector<8x128xf32>
    %c0_17 = arith.constant 0 : index
    %c0_18 = arith.constant 0 : index
    %21 = vector.load %arg8[%c0_17, %c0_18] : memref<1x128xf32, #tpu.memory_space<vmem>>, vector<1x128xf32>
    %22 = vector.broadcast %21 : vector<1x128xf32> to vector<8x128xf32>
    %23 = arith.mulf %20, %22 : vector<8x128xf32>
    %cst_19 = arith.constant dense<0.000000e+00> : vector<8xf32>
    %24 = vector.multi_reduction <add>, %23, %cst_19 [1] : vector<8x128xf32> to vector<8xf32>
    %25 = vector.shape_cast %24 : vector<8xf32> to vector<8x1xf32>
    %c0_20 = arith.constant 0 : index
    %26 = memref.load %arg9[%c0_20] : memref<1xf32, #tpu.memory_space<smem>>
    %27 = vector.broadcast %26 : f32 to vector<8x1xf32>
    %28 = arith.addf %25, %27 : vector<8x1xf32>
    %c0_21 = arith.constant 0 : index
    %c0_22 = arith.constant 0 : index
    %29 = vector.load %arg10[%c0_21, %c0_22] : memref<8x1xf32, #tpu.memory_space<vmem>>, vector<8x1xf32>
    tpu.vector_store %arg10[%c0_21, %c0_22], %28 {strides = array<i32>} : memref<8x1xf32, #tpu.memory_space<vmem>>, vector<8x1xf32>,
    return
  }
  func.func @transform_0(%arg0: i32) -> (i32, i32) {
    %c0_i32 = arith.constant 0 : i32
    %c0_i32_0 = arith.constant 0 : i32
    return %arg0, %c0_i32 : i32, i32
  }
  func.func @transform_1(%arg0: i32) -> (i32, i32) {
    %c0_i32 = arith.constant 0 : i32
    %c0_i32_0 = arith.constant 0 : i32
    return %arg0, %c0_i32 : i32, i32
  }
  func.func @transform_2(%arg0: i32) -> (i32, i32) {
    %c0_i32 = arith.constant 0 : i32
    %c0_i32_0 = arith.constant 0 : i32
    %c0_i32_1 = arith.constant 0 : i32
    return %c0_i32, %c0_i32_0 : i32, i32
  }
  func.func @transform_3(%arg0: i32) -> (i32, i32) {
    %c0_i32 = arith.constant 0 : i32
    %c0_i32_0 = arith.constant 0 : i32
    %c0_i32_1 = arith.constant 0 : i32
    return %c0_i32, %c0_i32_0 : i32, i32
  }
  func.func @transform_4(%arg0: i32) -> (i32, i32) {
    %c0_i32 = arith.constant 0 : i32
    %c0_i32_0 = arith.constant 0 : i32
    %c0_i32_1 = arith.constant 0 : i32
    return %c0_i32, %c0_i32_0 : i32, i32
  }
  func.func @transform_5(%arg0: i32) -> (i32, i32) {
    %c0_i32 = arith.constant 0 : i32
    %c0_i32_0 = arith.constant 0 : i32
    %c0_i32_1 = arith.constant 0 : i32
    return %c0_i32, %c0_i32_0 : i32, i32
  }
  func.func @transform_6(%arg0: i32) -> (i32, i32) {
    %c0_i32 = arith.constant 0 : i32
    %c0_i32_0 = arith.constant 0 : i32
    %c0_i32_1 = arith.constant 0 : i32
    return %c0_i32, %c0_i32_0 : i32, i32
  }
  func.func @transform_7(%arg0: i32) -> (i32, i32) {
    %c0_i32 = arith.constant 0 : i32
    %c0_i32_0 = arith.constant 0 : i32
    %c0_i32_1 = arith.constant 0 : i32
    return %c0_i32, %c0_i32_0 : i32, i32
  }
  func.func @transform_8(%arg0: i32) -> i32 {
    %c0_i32 = arith.constant 0 : i32
    %c0_i32_0 = arith.constant 0 : i32
    return %c0_i32 : i32
  }
  func.func @transform_9(%arg0: i32) -> (i32, i32) {
    %c0_i32 = arith.constant 0 : i32
    %c0_i32_0 = arith.constant 0 : i32
    return %arg0, %c0_i32 : i32, i32
  }
}

</mosaic_0001>

<llo_original>
// kernel: tpu_custom_call.1
$region0: #{tpu_custom_call.1}
  #allocation0 [shape = 'u32[]', space=smem, size = 0x4, offset = 0x4, fixed_abs, tag = 'smem constant byte address 0x4 - core index']
  #allocation1 [shape = 'u32[144,128]{1,0:T(1,128)}', space=vmem, size = 0x12000, scoped, tag = 'internal scratch']
  #allocation2 [shape = 'f32[1]{0:T(128)S(6)}', space=smem, size = 0x200, scoped, tag = 'scoped memory for tpu_custom_call.1']
  %s0 = inlined_call_operand.hbm [shape: f32[8,1024], index: 0, kind: input, shape index: {}]
  %s1 = inlined_call_operand.hbm [shape: f32[8,8], index: 1, kind: input, shape index: {}]
  %s2 = inlined_call_operand.hbm [shape: bf16[1024,128], index: 2, kind: input, shape index: {}]
  %s3 = inlined_call_operand.vmem [shape: f32[1,128], index: 3, kind: input, shape index: {}]
  %s4 = inlined_call_operand.hbm [shape: bf16[128,128], index: 4, kind: input, shape index: {}]
  %s5 = inlined_call_operand.vmem [shape: f32[8,128], index: 5, kind: input, shape index: {}]
  %s6 = inlined_call_operand.vmem [shape: f32[1,128], index: 6, kind: input, shape index: {}]
  %s7 = inlined_call_operand.vmem [shape: f32[1,128], index: 7, kind: input, shape index: {}]
  %s8 = inlined_call_operand.<no memory space> [shape: f32[1], index: 8, kind: input, shape index: {}]
  %s9 = inlined_call_operand.vmem [shape: f32[8,1], index: 9, kind: output, shape index: {}]
  %s10 = sld [smem:[#allocation0]]
  $region62: #{tpu_custom_call.1} parent=0
    _
  %s12 = ssub.s32 1, %s10
  %s13 = scalar_select 0, %s12, %s10
  %14 = sst [smem:[#allocation2]] %s8
  $region1: #{tpu_custom_call.1} parent=0
    #allocation3 [shape = 'u8[32768]{0}', space=vmem, size = 0x8000, scoped, tag = 'input window, operand 0, single buffered']
    #allocation4 [shape = 's32[1]{0}', space=sflag, size = 0x4, scoped, tag = 'scoped memory for tpu_custom_call.1']
    #allocation5 [shape = 'u8[4096]{0}', space=vmem, size = 0x1000, scoped, tag = 'input window, operand 1, single buffered']
    #allocation6 [shape = 's32[1]{0}', space=sflag, size = 0x4, scoped, tag = 'scoped memory for tpu_custom_call.1']
    #allocation7 [shape = 'u8[262144]{0}', space=vmem, size = 0x40000, scoped, tag = 'input window, operand 2, single buffered']
    #allocation8 [shape = 'u8[32768]{0}', space=vmem, size = 0x8000, scoped, tag = 'input window, operand 4, single buffered']
    #allocation9 [shape = 's32[1]{0}', space=sflag, size = 0x4, scoped, tag = 'scoped memory for tpu_custom_call.1']
    %15 = vsyncpa [#allocation4], 0
    %16 = vsyncpa [#allocation6], 0
    %17 = vsyncpa [#allocation9], 0
    // Predicated region
    $region2: #{tpu_custom_call.1} parent=1 // pred_check
      _
    $region3: #{tpu_custom_call.1} parent=1 // pred_check_branch
      %19 = sbr.rel (0) target = $region5
    $region4: #{tpu_custom_call.1} parent=1 // pred_region
      %s21 = ssub.s32 1024, 1024
      %22 = vsyncadd [#allocation4], %s21
      %s24 = sshll.u32 [#allocation3], 4
      %s25 = int_to_ptr.vmem [resolvable:$true] %s24
      %27 = dma.hbm_to_vmem [thread:$0]  %s0, 1024, %s25, [#allocation4]
    $region5: #{tpu_custom_call.1} parent=1 // pred_fallthru
      _
    // Predicated region
    $region6: #{tpu_custom_call.1} parent=1 // pred_check
      _
    $region7: #{tpu_custom_call.1} parent=1 // pred_check_branch
      %29 = sbr.rel (0) target = $region9
    $region8: #{tpu_custom_call.1} parent=1 // pred_region
      %s31 = ssub.s32 128, 128
      %32 = vsyncadd [#allocation6], %s31
      %s34 = sshll.u32 [#allocation5], 4
      %s35 = int_to_ptr.vmem [resolvable:$true] %s34
      %37 = dma.hbm_to_vmem [thread:$0]  %s1, 128, %s35, [#allocation6]
    $region9: #{tpu_custom_call.1} parent=1 // pred_fallthru
      _
    // Predicated region
    $region10: #{tpu_custom_call.1} parent=1 // pred_check
      _
    $region11: #{tpu_custom_call.1} parent=1 // pred_check_branch
      %39 = sbr.rel (0) target = $region13
    $region12: #{tpu_custom_call.1} parent=1 // pred_region
      %s41 = ssub.s32 8192, 8192
      %42 = vsyncadd [#allocation6], %s41
      %s43 = sshll.u32 [#allocation7], 4
      %s44 = int_to_ptr.vmem [resolvable:$true] %s43
      %49 = dma.hbm_to_vmem [thread:$0]  %s2, 8192, %s44, [#allocation6], 64, 64, 4
    $region13: #{tpu_custom_call.1} parent=1 // pred_fallthru
      _
    // Predicated region
    $region14: #{tpu_custom_call.1} parent=1 // pred_check
      _
    $region15: #{tpu_custom_call.1} parent=1 // pred_check_branch
      %51 = sbr.rel (0) target = $region17
    $region16: #{tpu_custom_call.1} parent=1 // pred_region
      _
    $region17: #{tpu_custom_call.1} parent=1 // pred_fallthru
      _
    // Predicated region
    $region18: #{tpu_custom_call.1} parent=1 // pred_check
      _
    $region19: #{tpu_custom_call.1} parent=1 // pred_check_branch
      %53 = sbr.rel (0) target = $region21
    $region20: #{tpu_custom_call.1} parent=1 // pred_region
      %s55 = ssub.s32 1024, 1024
      %56 = vsyncadd [#allocation9], %s55
      %s57 = sshll.u32 [#allocation8], 4
      %s58 = int_to_ptr.vmem [resolvable:$true] %s57
      %63 = dma.hbm_to_vmem [thread:$0]  %s4, 1024, %s58, [#allocation9], 64, 64, 4
    $region21: #{tpu_custom_call.1} parent=1 // pred_fallthru
      _
    // Predicated region
    $region22: #{tpu_custom_call.1} parent=1 // pred_check
      _
    $region23: #{tpu_custom_call.1} parent=1 // pred_check_branch
      %65 = sbr.rel (0) target = $region25
    $region24: #{tpu_custom_call.1} parent=1 // pred_region
      _
    $region25: #{tpu_custom_call.1} parent=1 // pred_fallthru
      _
    // Predicated region
    $region26: #{tpu_custom_call.1} parent=1 // pred_check
      _
    $region27: #{tpu_custom_call.1} parent=1 // pred_check_branch
      %67 = sbr.rel (0) target = $region29
    $region28: #{tpu_custom_call.1} parent=1 // pred_region
      _
    $region29: #{tpu_custom_call.1} parent=1 // pred_fallthru
      _
    // Predicated region
    $region30: #{tpu_custom_call.1} parent=1 // pred_check
      _
    $region31: #{tpu_custom_call.1} parent=1 // pred_check_branch
      %69 = sbr.rel (0) target = $region33
    $region32: #{tpu_custom_call.1} parent=1 // pred_region
      _
    $region33: #{tpu_custom_call.1} parent=1 // pred_fallthru
      _
    // Predicated region
    $region34: #{tpu_custom_call.1} parent=1 // pred_check
      _
    $region35: #{tpu_custom_call.1} parent=1 // pred_check_branch
      %71 = sbr.rel (0) target = $region37
    $region36: #{tpu_custom_call.1} parent=1 // pred_region
      _
    $region37: #{tpu_custom_call.1} parent=1 // pred_fallthru
      _
    // Predicated region
    $region38: #{tpu_custom_call.1} parent=1 // pred_check
      _
    $region39: #{tpu_custom_call.1} parent=1 // pred_check_branch
      %73 = sbr.rel (0) target = $region41
    $region40: #{tpu_custom_call.1} parent=1 // pred_region
      %74 = dma.done [#allocation4], 1024
    $region41: #{tpu_custom_call.1} parent=1 // pred_fallthru
      _
    // Predicated region
    $region42: #{tpu_custom_call.1} parent=1 // pred_check
      _
    $region43: #{tpu_custom_call.1} parent=1 // pred_check_branch
      %76 = sbr.rel (0) target = $region45
    $region44: #{tpu_custom_call.1} parent=1 // pred_region
      %77 = dma.done [#allocation6], 128
    $region45: #{tpu_custom_call.1} parent=1 // pred_fallthru
      _
    // Predicated region
    $region46: #{tpu_custom_call.1} parent=1 // pred_check
      _
    $region47: #{tpu_custom_call.1} parent=1 // pred_check_branch
      %79 = sbr.rel (0) target = $region49
    $region48: #{tpu_custom_call.1} parent=1 // pred_region
      %80 = dma.done [#allocation6], 8192
    $region49: #{tpu_custom_call.1} parent=1 // pred_fallthru
      _
    // Predicated region
    $region50: #{tpu_custom_call.1} parent=1 // pred_check
      _
    $region51: #{tpu_custom_call.1} parent=1 // pred_check_branch
      %82 = sbr.rel (0) target = $region53
    $region52: #{tpu_custom_call.1} parent=1 // pred_region
      %83 = dma.done [#allocation9], 1024
    $region53: #{tpu_custom_call.1} parent=1 // pred_fallthru
      _
    %v85 = vld [vmem:[#allocation3] sm:$0xff]
    %v86 = vld [vmem:[#allocation3 + $0x8] sm:$0xff]
    %v87 = vld [vmem:[#allocation3 + $0x10] sm:$0xff]
    %v88 = vld [vmem:[#allocation3 + $0x18] sm:$0xff]
    %v89 = vld [vmem:[#allocation3 + $0x20] sm:$0xff]
    %v90 = vld [vmem:[#allocation3 + $0x28] sm:$0xff]
    %v91 = vld [vmem:[#allocation3 + $0x30] sm:$0xff]
    %v92 = vld [vmem:[#allocation3 + $0x38] sm:$0xff]
    %v93 = vpack.c.bf16 %v85, %v85
    %v94 = vpack.c.bf16 %v86, %v86
    %v95 = vpack.c.bf16 %v87, %v87
    %v96 = vpack.c.bf16 %v88, %v88
    %v97 = vpack.c.bf16 %v89, %v89
    %v98 = vpack.c.bf16 %v90, %v90
    %v99 = vpack.c.bf16 %v91, %v91
    %v100 = vpack.c.bf16 %v92, %v92
    %v101 = vld [vmem:[#allocation7] sm:$0xf]
    %v102 = vld [vmem:[#allocation7 + $0x4] sm:$0xf]
    %v103 = vld [vmem:[#allocation7 + $0x8] sm:$0xf]
    %v104 = vld [vmem:[#allocation7 + $0xc] sm:$0xf]
    %v105 = vld [vmem:[#allocation7 + $0x10] sm:$0xf]
    %v106 = vld [vmem:[#allocation7 + $0x14] sm:$0xf]
    %v107 = vld [vmem:[#allocation7 + $0x18] sm:$0xf]
    %v108 = vld [vmem:[#allocation7 + $0x1c] sm:$0xf]
    %v109 = vld [vmem:[#allocation7 + $0x20] sm:$0xf]
    %v110 = vld [vmem:[#allocation7 + $0x24] sm:$0xf]
    %v111 = vld [vmem:[#allocation7 + $0x28] sm:$0xf]
    %v112 = vld [vmem:[#allocation7 + $0x2c] sm:$0xf]
    %v113 = vld [vmem:[#allocation7 + $0x30] sm:$0xf]
    %v114 = vld [vmem:[#allocation7 + $0x34] sm:$0xf]
    %v115 = vld [vmem:[#allocation7 + $0x38] sm:$0xf]
    %v116 = vld [vmem:[#allocation7 + $0x3c] sm:$0xf]
    %v117 = vld [vmem:[#allocation7 + $0x40] sm:$0xf]
    %v118 = vld [vmem:[#allocation7 + $0x44] sm:$0xf]
    %v119 = vld [vmem:[#allocation7 + $0x48] sm:$0xf]
    %v120 = vld [vmem:[#allocation7 + $0x4c] sm:$0xf]
    %v121 = vld [vmem:[#allocation7 + $0x50] sm:$0xf]
    %v122 = vld [vmem:[#allocation7 + $0x54] sm:$0xf]
    %v123 = vld [vmem:[#allocation7 + $0x58] sm:$0xf]
    %v124 = vld [vmem:[#allocation7 + $0x5c] sm:$0xf]
    %v125 = vld [vmem:[#allocation7 + $0x60] sm:$0xf]
    %v126 = vld [vmem:[#allocation7 + $0x64] sm:$0xf]
    %v127 = vld [vmem:[#allocation7 + $0x68] sm:$0xf]
    %v128 = vld [vmem:[#allocation7 + $0x6c] sm:$0xf]
    %v129 = vld [vmem:[#allocation7 + $0x70] sm:$0xf]
    %v130 = vld [vmem:[#allocation7 + $0x74] sm:$0xf]
    %v131 = vld [vmem:[#allocation7 + $0x78] sm:$0xf]
    %v132 = vld [vmem:[#allocation7 + $0x7c] sm:$0xf]
    %v133 = vld [vmem:[#allocation7 + $0x80] sm:$0xf]
    %v134 = vld [vmem:[#allocation7 + $0x84] sm:$0xf]
    %v135 = vld [vmem:[#allocation7 + $0x88] sm:$0xf]
    %v136 = vld [vmem:[#allocation7 + $0x8c] sm:$0xf]
    %v137 = vld [vmem:[#allocation7 + $0x90] sm:$0xf]
    %v138 = vld [vmem:[#allocation7 + $0x94] sm:$0xf]
    %v139 = vld [vmem:[#allocation7 + $0x98] sm:$0xf]
    %v140 = vld [vmem:[#allocation7 + $0x9c] sm:$0xf]
    %v141 = vld [vmem:[#allocation7 + $0xa0] sm:$0xf]
    %v142 = vld [vmem:[#allocation7 + $0xa4] sm:$0xf]
    %v143 = vld [vmem:[#allocation7 + $0xa8] sm:$0xf]
    %v144 = vld [vmem:[#allocation7 + $0xac] sm:$0xf]
    %v145 = vld [vmem:[#allocation7 + $0xb0] sm:$0xf]
    %v146 = vld [vmem:[#allocation7 + $0xb4] sm:$0xf]
    %v147 = vld [vmem:[#allocation7 + $0xb8] sm:$0xf]
    %v148 = vld [vmem:[#allocation7 + $0xbc] sm:$0xf]
    %v149 = vld [vmem:[#allocation7 + $0xc0] sm:$0xf]
    %v150 = vld [vmem:[#allocation7 + $0xc4] sm:$0xf]
    %v151 = vld [vmem:[#allocation7 + $0xc8] sm:$0xf]
    %v152 = vld [vmem:[#allocation7 + $0xcc] sm:$0xf]
    %v153 = vld [vmem:[#allocation7 + $0xd0] sm:$0xf]
    %v154 = vld [vmem:[#allocation7 + $0xd4] sm:$0xf]
    %v155 = vld [vmem:[#allocation7 + $0xd8] sm:$0xf]
    %v156 = vld [vmem:[#allocation7 + $0xdc] sm:$0xf]
    %v157 = vld [vmem:[#allocation7 + $0xe0] sm:$0xf]
    %v158 = vld [vmem:[#allocation7 + $0xe4] sm:$0xf]
    %v159 = vld [vmem:[#allocation7 + $0xe8] sm:$0xf]
    %v160 = vld [vmem:[#allocation7 + $0xec] sm:$0xf]
    %v161 = vld [vmem:[#allocation7 + $0xf0] sm:$0xf]
    %v162 = vld [vmem:[#allocation7 + $0xf4] sm:$0xf]
    %v163 = vld [vmem:[#allocation7 + $0xf8] sm:$0xf]
    %v164 = vld [vmem:[#allocation7 + $0xfc] sm:$0xf]
    %v165 = vld [vmem:[#allocation7 + $0x100] sm:$0xf]
    %v166 = vld [vmem:[#allocation7 + $0x104] sm:$0xf]
    %v167 = vld [vmem:[#allocation7 + $0x108] sm:$0xf]
    %v168 = vld [vmem:[#allocation7 + $0x10c] sm:$0xf]
    %v169 = vld [vmem:[#allocation7 + $0x110] sm:$0xf]
    %v170 = vld [vmem:[#allocation7 + $0x114] sm:$0xf]
    %v171 = vld [vmem:[#allocation7 + $0x118] sm:$0xf]
    %v172 = vld [vmem:[#allocation7 + $0x11c] sm:$0xf]
    %v173 = vld [vmem:[#allocation7 + $0x120] sm:$0xf]
    %v174 = vld [vmem:[#allocation7 + $0x124] sm:$0xf]
    %v175 = vld [vmem:[#allocation7 + $0x128] sm:$0xf]
    %v176 = vld [vmem:[#allocation7 + $0x12c] sm:$0xf]
    %v177 = vld [vmem:[#allocation7 + $0x130] sm:$0xf]
    %v178 = vld [vmem:[#allocation7 + $0x134] sm:$0xf]
    %v179 = vld [vmem:[#allocation7 + $0x138] sm:$0xf]
    %v180 = vld [vmem:[#allocation7 + $0x13c] sm:$0xf]
    %v181 = vld [vmem:[#allocation7 + $0x140] sm:$0xf]
    %v182 = vld [vmem:[#allocation7 + $0x144] sm:$0xf]
    %v183 = vld [vmem:[#allocation7 + $0x148] sm:$0xf]
    %v184 = vld [vmem:[#allocation7 + $0x14c] sm:$0xf]
    %v185 = vld [vmem:[#allocation7 + $0x150] sm:$0xf]
    %v186 = vld [vmem:[#allocation7 + $0x154] sm:$0xf]
    %v187 = vld [vmem:[#allocation7 + $0x158] sm:$0xf]
    %v188 = vld [vmem:[#allocation7 + $0x15c] sm:$0xf]
    %v189 = vld [vmem:[#allocation7 + $0x160] sm:$0xf]
    %v190 = vld [vmem:[#allocation7 + $0x164] sm:$0xf]
    %v191 = vld [vmem:[#allocation7 + $0x168] sm:$0xf]
    %v192 = vld [vmem:[#allocation7 + $0x16c] sm:$0xf]
    %v193 = vld [vmem:[#allocation7 + $0x170] sm:$0xf]
    %v194 = vld [vmem:[#allocation7 + $0x174] sm:$0xf]
    %v195 = vld [vmem:[#allocation7 + $0x178] sm:$0xf]
    %v196 = vld [vmem:[#allocation7 + $0x17c] sm:$0xf]
    %v197 = vld [vmem:[#allocation7 + $0x180] sm:$0xf]
    %v198 = vld [vmem:[#allocation7 + $0x184] sm:$0xf]
    %v199 = vld [vmem:[#allocation7 + $0x188] sm:$0xf]
    %v200 = vld [vmem:[#allocation7 + $0x18c] sm:$0xf]
    %v201 = vld [vmem:[#allocation7 + $0x190] sm:$0xf]
    %v202 = vld [vmem:[#allocation7 + $0x194] sm:$0xf]
    %v203 = vld [vmem:[#allocation7 + $0x198] sm:$0xf]
    %v204 = vld [vmem:[#allocation7 + $0x19c] sm:$0xf]
    %v205 = vld [vmem:[#allocation7 + $0x1a0] sm:$0xf]
    %v206 = vld [vmem:[#allocation7 + $0x1a4] sm:$0xf]
    %v207 = vld [vmem:[#allocation7 + $0x1a8] sm:$0xf]
    %v208 = vld [vmem:[#allocation7 + $0x1ac] sm:$0xf]
    %v209 = vld [vmem:[#allocation7 + $0x1b0] sm:$0xf]
    %v210 = vld [vmem:[#allocation7 + $0x1b4] sm:$0xf]
    %v211 = vld [vmem:[#allocation7 + $0x1b8] sm:$0xf]
    %v212 = vld [vmem:[#allocation7 + $0x1bc] sm:$0xf]
    %v213 = vld [vmem:[#allocation7 + $0x1c0] sm:$0xf]
    %v214 = vld [vmem:[#allocation7 + $0x1c4] sm:$0xf]
    %v215 = vld [vmem:[#allocation7 + $0x1c8] sm:$0xf]
    %v216 = vld [vmem:[#allocation7 + $0x1cc] sm:$0xf]
    %v217 = vld [vmem:[#allocation7 + $0x1d0] sm:$0xf]
    %v218 = vld [vmem:[#allocation7 + $0x1d4] sm:$0xf]
    %v219 = vld [vmem:[#allocation7 + $0x1d8] sm:$0xf]
    %v220 = vld [vmem:[#allocation7 + $0x1dc] sm:$0xf]
    %v221 = vld [vmem:[#allocation7 + $0x1e0] sm:$0xf]
    %v222 = vld [vmem:[#allocation7 + $0x1e4] sm:$0xf]
    %v223 = vld [vmem:[#allocation7 + $0x1e8] sm:$0xf]
    %v224 = vld [vmem:[#allocation7 + $0x1ec] sm:$0xf]
    %v225 = vld [vmem:[#allocation7 + $0x1f0] sm:$0xf]
    %v226 = vld [vmem:[#allocation7 + $0x1f4] sm:$0xf]
    %v227 = vld [vmem:[#allocation7 + $0x1f8] sm:$0xf]
    %v228 = vld [vmem:[#allocation7 + $0x1fc] sm:$0xf]
    %v229 = vld [vmem:[%s3] sm:$0x1]
    %v231 = vlaneseq
    %v232 = vshrl.u32 %v231, 7
    %v233 = vsub.s32 0, %v232
    %v234 = vrot.slane %v229, %v233
    %v364 = vunpack.c.l.b16 %v101
    %v365 = vunpack.c.l.b16 %v102
    %v366 = vunpack.c.l.b16 %v103
    %v367 = vunpack.c.l.b16 %v104
    %v368 = vunpack.c.l.b16 %v105
    %v369 = vunpack.c.l.b16 %v106
    %v370 = vunpack.c.l.b16 %v107
    %v371 = vunpack.c.l.b16 %v108
    %v372 = vunpack.c.l.b16 %v109
    %v373 = vunpack.c.l.b16 %v110
    %v374 = vunpack.c.l.b16 %v111
    %v375 = vunpack.c.l.b16 %v112
    %v376 = vunpack.c.l.b16 %v113
    %v377 = vunpack.c.l.b16 %v114
    %v378 = vunpack.c.l.b16 %v115
    %v379 = vunpack.c.l.b16 %v116
    %v380 = vunpack.c.l.b16 %v117
    %v381 = vunpack.c.l.b16 %v118
    %v382 = vunpack.c.l.b16 %v119
    %v383 = vunpack.c.l.b16 %v120
    %v384 = vunpack.c.l.b16 %v121
    %v385 = vunpack.c.l.b16 %v122
    %v386 = vunpack.c.l.b16 %v123
    %v387 = vunpack.c.l.b16 %v124
    %v388 = vunpack.c.l.b16 %v125
    %v389 = vunpack.c.l.b16 %v126
    %v390 = vunpack.c.l.b16 %v127
    %v391 = vunpack.c.l.b16 %v128
    %v392 = vunpack.c.l.b16 %v129
    %v393 = vunpack.c.l.b16 %v130
    %v394 = vunpack.c.l.b16 %v131
    %v395 = vunpack.c.l.b16 %v132
    %v396 = vunpack.c.l.b16 %v133
    %v397 = vunpack.c.l.b16 %v134
    %v398 = vunpack.c.l.b16 %v135
    %v399 = vunpack.c.l.b16 %v136
    %v400 = vunpack.c.l.b16 %v137
    %v401 = vunpack.c.l.b16 %v138
    %v402 = vunpack.c.l.b16 %v139
    %v403 = vunpack.c.l.b16 %v140
    %v404 = vunpack.c.l.b16 %v141
    %v405 = vunpack.c.l.b16 %v142
    %v406 = vunpack.c.l.b16 %v143
    %v407 = vunpack.c.l.b16 %v144
    %v408 = vunpack.c.l.b16 %v145
    %v409 = vunpack.c.l.b16 %v146
    %v410 = vunpack.c.l.b16 %v147
    %v411 = vunpack.c.l.b16 %v148
    %v412 = vunpack.c.l.b16 %v149
    %v413 = vunpack.c.l.b16 %v150
    %v414 = vunpack.c.l.b16 %v151
    %v415 = vunpack.c.l.b16 %v152
    %v416 = vunpack.c.l.b16 %v153
    %v417 = vunpack.c.l.b16 %v154
    %v418 = vunpack.c.l.b16 %v155
    %v419 = vunpack.c.l.b16 %v156
    %v420 = vunpack.c.l.b16 %v157
    %v421 = vunpack.c.l.b16 %v158
    %v422 = vunpack.c.l.b16 %v159
    %v423 = vunpack.c.l.b16 %v160
    %v424 = vunpack.c.l.b16 %v161
    %v425 = vunpack.c.l.b16 %v162
    %v426 = vunpack.c.l.b16 %v163
    %v427 = vunpack.c.l.b16 %v164
    %v428 = vunpack.c.l.b16 %v165
    %v429 = vunpack.c.l.b16 %v166
    %v430 = vunpack.c.l.b16 %v167
    %v431 = vunpack.c.l.b16 %v168
    %v432 = vunpack.c.l.b16 %v169
    %v433 = vunpack.c.l.b16 %v170
    %v434 = vunpack.c.l.b16 %v171
    %v435 = vunpack.c.l.b16 %v172
    %v436 = vunpack.c.l.b16 %v173
    %v437 = vunpack.c.l.b16 %v174
    %v438 = vunpack.c.l.b16 %v175
    %v439 = vunpack.c.l.b16 %v176
    %v440 = vunpack.c.l.b16 %v177
    %v441 = vunpack.c.l.b16 %v178
    %v442 = vunpack.c.l.b16 %v179
    %v443 = vunpack.c.l.b16 %v180
    %v444 = vunpack.c.l.b16 %v181
    %v445 = vunpack.c.l.b16 %v182
    %v446 = vunpack.c.l.b16 %v183
    %v447 = vunpack.c.l.b16 %v184
    %v448 = vunpack.c.l.b16 %v185
    %v449 = vunpack.c.l.b16 %v186
    %v450 = vunpack.c.l.b16 %v187
    %v451 = vunpack.c.l.b16 %v188
    %v452 = vunpack.c.l.b16 %v189
    %v453 = vunpack.c.l.b16 %v190
    %v454 = vunpack.c.l.b16 %v191
    %v455 = vunpack.c.l.b16 %v192
    %v456 = vunpack.c.l.b16 %v193
    %v457 = vunpack.c.l.b16 %v194
    %v458 = vunpack.c.l.b16 %v195
    %v459 = vunpack.c.l.b16 %v196
    %v460 = vunpack.c.l.b16 %v197
    %v461 = vunpack.c.l.b16 %v198
    %v462 = vunpack.c.l.b16 %v199
    %v463 = vunpack.c.l.b16 %v200
    %v464 = vunpack.c.l.b16 %v201
    %v465 = vunpack.c.l.b16 %v202
    %v466 = vunpack.c.l.b16 %v203
    %v467 = vunpack.c.l.b16 %v204
    %v468 = vunpack.c.l.b16 %v205
    %v469 = vunpack.c.l.b16 %v206
    %v470 = vunpack.c.l.b16 %v207
    %v471 = vunpack.c.l.b16 %v208
    %v472 = vunpack.c.l.b16 %v209
    %v473 = vunpack.c.l.b16 %v210
    %v474 = vunpack.c.l.b16 %v211
    %v475 = vunpack.c.l.b16 %v212
    %v476 = vunpack.c.l.b16 %v213
    %v477 = vunpack.c.l.b16 %v214
    %v478 = vunpack.c.l.b16 %v215
    %v479 = vunpack.c.l.b16 %v216
    %v480 = vunpack.c.l.b16 %v217
    %v481 = vunpack.c.l.b16 %v218
    %v482 = vunpack.c.l.b16 %v219
    %v483 = vunpack.c.l.b16 %v220
    %v484 = vunpack.c.l.b16 %v221
    %v485 = vunpack.c.l.b16 %v222
    %v486 = vunpack.c.l.b16 %v223
    %v487 = vunpack.c.l.b16 %v224
    %v488 = vunpack.c.l.b16 %v225
    %v489 = vunpack.c.l.b16 %v226
    %v490 = vunpack.c.l.b16 %v227
    %v491 = vunpack.c.l.b16 %v228
    %v492 = vpack.c.b16 %v365, %v364
    %v493 = vpack.c.b16 %v367, %v366
    %v494 = vpack.c.b16 %v369, %v368
    %v495 = vpack.c.b16 %v371, %v370
    %v496 = vpack.c.b16 %v373, %v372
    %v497 = vpack.c.b16 %v375, %v374
    %v498 = vpack.c.b16 %v377, %v376
    %v499 = vpack.c.b16 %v379, %v378
    %v500 = vpack.c.b16 %v381, %v380
    %v501 = vpack.c.b16 %v383, %v382
    %v502 = vpack.c.b16 %v385, %v384
    %v503 = vpack.c.b16 %v387, %v386
    %v504 = vpack.c.b16 %v389, %v388
    %v505 = vpack.c.b16 %v391, %v390
    %v506 = vpack.c.b16 %v393, %v392
    %v507 = vpack.c.b16 %v395, %v394
    %v508 = vpack.c.b16 %v397, %v396
    %v509 = vpack.c.b16 %v399, %v398
    %v510 = vpack.c.b16 %v401, %v400
    %v511 = vpack.c.b16 %v403, %v402
    %v512 = vpack.c.b16 %v405, %v404
    %v513 = vpack.c.b16 %v407, %v406
    %v514 = vpack.c.b16 %v409, %v408
    %v515 = vpack.c.b16 %v411, %v410
    %v516 = vpack.c.b16 %v413, %v412
    %v517 = vpack.c.b16 %v415, %v414
    %v518 = vpack.c.b16 %v417, %v416
    %v519 = vpack.c.b16 %v419, %v418
    %v520 = vpack.c.b16 %v421, %v420
    %v521 = vpack.c.b16 %v423, %v422
    %v522 = vpack.c.b16 %v425, %v424
    %v523 = vpack.c.b16 %v427, %v426
    %v524 = vpack.c.b16 %v429, %v428
    %v525 = vpack.c.b16 %v431, %v430
    %v526 = vpack.c.b16 %v433, %v432
    %v527 = vpack.c.b16 %v435, %v434
    %v528 = vpack.c.b16 %v437, %v436
    %v529 = vpack.c.b16 %v439, %v438
    %v530 = vpack.c.b16 %v441, %v440
    %v531 = vpack.c.b16 %v443, %v442
    %v532 = vpack.c.b16 %v445, %v444
    %v533 = vpack.c.b16 %v447, %v446
    %v534 = vpack.c.b16 %v449, %v448
    %v535 = vpack.c.b16 %v451, %v450
    %v536 = vpack.c.b16 %v453, %v452
    %v537 = vpack.c.b16 %v455, %v454
    %v538 = vpack.c.b16 %v457, %v456
    %v539 = vpack.c.b16 %v459, %v458
    %v540 = vpack.c.b16 %v461, %v460
    %v541 = vpack.c.b16 %v463, %v462
    %v542 = vpack.c.b16 %v465, %v464
    %v543 = vpack.c.b16 %v467, %v466
    %v544 = vpack.c.b16 %v469, %v468
    %v545 = vpack.c.b16 %v471, %v470
    %v546 = vpack.c.b16 %v473, %v472
    %v547 = vpack.c.b16 %v475, %v474
    %v548 = vpack.c.b16 %v477, %v476
    %v549 = vpack.c.b16 %v479, %v478
    %v550 = vpack.c.b16 %v481, %v480
    %v551 = vpack.c.b16 %v483, %v482
    %v552 = vpack.c.b16 %v485, %v484
    %v553 = vpack.c.b16 %v487, %v486
    %v554 = vpack.c.b16 %v489, %v488
    %v555 = vpack.c.b16 %v491, %v490
    %620 = vmatprep.subr.bf16.mxu0 0
    %621 = vmatpush1.bf16.msra.mxu0 %v492
    %622 = vmatprep.subr.bf16.mxu0 0
    %623 = vmatpush1.bf16.msra.mxu0 %v493
    %624 = vmatprep.subr.bf16.mxu0 0
    %625 = vmatpush1.bf16.msra.mxu0 %v494
    %626 = vmatprep.subr.bf16.mxu0 0
    %627 = vmatpush1.bf16.msra.mxu0 %v495
    %628 = vmatprep.subr.bf16.mxu0 0
    %629 = vmatpush1.bf16.msra.mxu0 %v496
    %630 = vmatprep.subr.bf16.mxu0 0
    %631 = vmatpush1.bf16.msra.mxu0 %v497
    %632 = vmatprep.subr.bf16.mxu0 0
    %633 = vmatpush1.bf16.msra.mxu0 %v498
    %634 = vmatprep.subr.bf16.mxu0 0
    %635 = vmatpush1.bf16.msra.mxu0 %v499
    %636 = vmatprep.subr.bf16.mxu0 0
    %637 = vmatpush1.bf16.msra.mxu0 %v500
    %638 = vmatprep.subr.bf16.mxu0 0
    %639 = vmatpush1.bf16.msra.mxu0 %v501
    %640 = vmatprep.subr.bf16.mxu0 0
    %641 = vmatpush1.bf16.msra.mxu0 %v502
    %642 = vmatprep.subr.bf16.mxu0 0
    %643 = vmatpush1.bf16.msra.mxu0 %v503
    %644 = vmatprep.subr.bf16.mxu0 0
    %645 = vmatpush1.bf16.msra.mxu0 %v504
    %646 = vmatprep.subr.bf16.mxu0 0
    %647 = vmatpush1.bf16.msra.mxu0 %v505
    %648 = vmatprep.subr.bf16.mxu0 0
    %649 = vmatpush1.bf16.msra.mxu0 %v506
    %650 = vmatprep.subr.bf16.mxu0 0
    %651 = vmatpush1.bf16.msra.mxu0 %v507
    %652 = vmatprep.mubr.bf16.mxu0 %v94
    %653 = vmatmul.mubr.bf16.gmra.mrb[0].mxu0 %v93
    %v654 = vpop.f32.mrb[0].mxu0
    %v655 = vadd.f32 %v234, %v654
    %v656 = vpop.f32.mrb[0].mxu0
    %v657 = vpop.f32.mrb[0].mxu0
    %v658 = vpop.f32.mrb[0].mxu0
    %659 = vdwg.mxu0
    %660 = vmatprep.subr.bf16.mxu0 0
    %661 = vmatpush1.bf16.msra.mxu0 %v508
    %662 = vmatprep.subr.bf16.mxu0 0
    %663 = vmatpush1.bf16.msra.mxu0 %v509
    %664 = vmatprep.subr.bf16.mxu0 0
    %665 = vmatpush1.bf16.msra.mxu0 %v510
    %666 = vmatprep.subr.bf16.mxu0 0
    %667 = vmatpush1.bf16.msra.mxu0 %v511
    %668 = vmatprep.subr.bf16.mxu0 0
    %669 = vmatpush1.bf16.msra.mxu0 %v512
    %670 = vmatprep.subr.bf16.mxu0 0
    %671 = vmatpush1.bf16.msra.mxu0 %v513
    %672 = vmatprep.subr.bf16.mxu0 0
    %673 = vmatpush1.bf16.msra.mxu0 %v514
    %674 = vmatprep.subr.bf16.mxu0 0
    %675 = vmatpush1.bf16.msra.mxu0 %v515
    %676 = vmatprep.subr.bf16.mxu0 0
    %677 = vmatpush1.bf16.msra.mxu0 %v516
    %678 = vmatprep.subr.bf16.mxu0 0
    %679 = vmatpush1.bf16.msra.mxu0 %v517
    %680 = vmatprep.subr.bf16.mxu0 0
    %681 = vmatpush1.bf16.msra.mxu0 %v518
    %682 = vmatprep.subr.bf16.mxu0 0
    %683 = vmatpush1.bf16.msra.mxu0 %v519
    %684 = vmatprep.subr.bf16.mxu0 0
    %685 = vmatpush1.bf16.msra.mxu0 %v520
    %686 = vmatprep.subr.bf16.mxu0 0
    %687 = vmatpush1.bf16.msra.mxu0 %v521
    %688 = vmatprep.subr.bf16.mxu0 0
    %689 = vmatpush1.bf16.msra.mxu0 %v522
    %690 = vmatprep.subr.bf16.mxu0 0
    %691 = vmatpush1.bf16.msra.mxu0 %v523
    %692 = vmatprep.mubr.bf16.mxu0 %v96
    %693 = vmatmul.mubr.bf16.gmra.mrb[0].mxu0 %v95
    %v694 = vpop.f32.mrb[0].mxu0
    %v695 = vadd.f32 %v655, %v694
    %v696 = vpop.f32.mrb[0].mxu0
    %v697 = vpop.f32.mrb[0].mxu0
    %v698 = vpop.f32.mrb[0].mxu0
    %699 = vdwg.mxu0
    %700 = vmatprep.subr.bf16.mxu0 0
    %701 = vmatpush1.bf16.msra.mxu0 %v524
    %702 = vmatprep.subr.bf16.mxu0 0
    %703 = vmatpush1.bf16.msra.mxu0 %v525
    %704 = vmatprep.subr.bf16.mxu0 0
    %705 = vmatpush1.bf16.msra.mxu0 %v526
    %706 = vmatprep.subr.bf16.mxu0 0
    %707 = vmatpush1.bf16.msra.mxu0 %v527
    %708 = vmatprep.subr.bf16.mxu0 0
    %709 = vmatpush1.bf16.msra.mxu0 %v528
    %710 = vmatprep.subr.bf16.mxu0 0
    %711 = vmatpush1.bf16.msra.mxu0 %v529
    %712 = vmatprep.subr.bf16.mxu0 0
    %713 = vmatpush1.bf16.msra.mxu0 %v530
    %714 = vmatprep.subr.bf16.mxu0 0
    %715 = vmatpush1.bf16.msra.mxu0 %v531
    %716 = vmatprep.subr.bf16.mxu0 0
    %717 = vmatpush1.bf16.msra.mxu0 %v532
    %718 = vmatprep.subr.bf16.mxu0 0
    %719 = vmatpush1.bf16.msra.mxu0 %v533
    %720 = vmatprep.subr.bf16.mxu0 0
    %721 = vmatpush1.bf16.msra.mxu0 %v534
    %722 = vmatprep.subr.bf16.mxu0 0
    %723 = vmatpush1.bf16.msra.mxu0 %v535
    %724 = vmatprep.subr.bf16.mxu0 0
    %725 = vmatpush1.bf16.msra.mxu0 %v536
    %726 = vmatprep.subr.bf16.mxu0 0
    %727 = vmatpush1.bf16.msra.mxu0 %v537
    %728 = vmatprep.subr.bf16.mxu0 0
    %729 = vmatpush1.bf16.msra.mxu0 %v538
    %730 = vmatprep.subr.bf16.mxu0 0
    %731 = vmatpush1.bf16.msra.mxu0 %v539
    %732 = vmatprep.mubr.bf16.mxu0 %v98
    %733 = vmatmul.mubr.bf16.gmra.mrb[0].mxu0 %v97
    %v734 = vpop.f32.mrb[0].mxu0
    %v735 = vadd.f32 %v695, %v734
    %v736 = vpop.f32.mrb[0].mxu0
    %v737 = vpop.f32.mrb[0].mxu0
    %v738 = vpop.f32.mrb[0].mxu0
    %739 = vdwg.mxu0
    %740 = vmatprep.subr.bf16.mxu0 0
    %741 = vmatpush1.bf16.msra.mxu0 %v540
    %742 = vmatprep.subr.bf16.mxu0 0
    %743 = vmatpush1.bf16.msra.mxu0 %v541
    %744 = vmatprep.subr.bf16.mxu0 0
    %745 = vmatpush1.bf16.msra.mxu0 %v542
    %746 = vmatprep.subr.bf16.mxu0 0
    %747 = vmatpush1.bf16.msra.mxu0 %v543
    %748 = vmatprep.subr.bf16.mxu0 0
    %749 = vmatpush1.bf16.msra.mxu0 %v544
    %750 = vmatprep.subr.bf16.mxu0 0
    %751 = vmatpush1.bf16.msra.mxu0 %v545
    %752 = vmatprep.subr.bf16.mxu0 0
    %753 = vmatpush1.bf16.msra.mxu0 %v546
    %754 = vmatprep.subr.bf16.mxu0 0
    %755 = vmatpush1.bf16.msra.mxu0 %v547
    %756 = vmatprep.subr.bf16.mxu0 0
    %757 = vmatpush1.bf16.msra.mxu0 %v548
    %758 = vmatprep.subr.bf16.mxu0 0
    %759 = vmatpush1.bf16.msra.mxu0 %v549
    %760 = vmatprep.subr.bf16.mxu0 0
    %761 = vmatpush1.bf16.msra.mxu0 %v550
    %762 = vmatprep.subr.bf16.mxu0 0
    %763 = vmatpush1.bf16.msra.mxu0 %v551
    %764 = vmatprep.subr.bf16.mxu0 0
    %765 = vmatpush1.bf16.msra.mxu0 %v552
    %766 = vmatprep.subr.bf16.mxu0 0
    %767 = vmatpush1.bf16.msra.mxu0 %v553
    %768 = vmatprep.subr.bf16.mxu0 0
    %769 = vmatpush1.bf16.msra.mxu0 %v554
    %770 = vmatprep.subr.bf16.mxu0 0
    %771 = vmatpush1.bf16.msra.mxu0 %v555
    %772 = vmatprep.mubr.bf16.mxu0 %v100
    %773 = vmatmul.mubr.bf16.gmra.mrb[0].mxu0 %v99
    %v774 = vpop.f32.mrb[0].mxu0
    %v775 = vadd.f32 %v735, %v774
    %v776 = vpop.f32.mrb[0].mxu0
    %v777 = vpop.f32.mrb[0].mxu0
    %v778 = vpop.f32.mrb[0].mxu0
    %779 = vdwg.mxu0
    %v780 = vmax.f32 %v775, 0.0
    %v781 = vpack.c.bf16 %v780, %v780
    %v782 = vld [vmem:[#allocation8] sm:$0xf]
    %v783 = vld [vmem:[#allocation8 + $0x4] sm:$0xf]
    %v784 = vld [vmem:[#allocation8 + $0x8] sm:$0xf]
    %v785 = vld [vmem:[#allocation8 + $0xc] sm:$0xf]
    %v786 = vld [vmem:[#allocation8 + $0x10] sm:$0xf]
    %v787 = vld [vmem:[#allocation8 + $0x14] sm:$0xf]
    %v788 = vld [vmem:[#allocation8 + $0x18] sm:$0xf]
    %v789 = vld [vmem:[#allocation8 + $0x1c] sm:$0xf]
    %v790 = vld [vmem:[#allocation8 + $0x20] sm:$0xf]
    %v791 = vld [vmem:[#allocation8 + $0x24] sm:$0xf]
    %v792 = vld [vmem:[#allocation8 + $0x28] sm:$0xf]
    %v793 = vld [vmem:[#allocation8 + $0x2c] sm:$0xf]
    %v794 = vld [vmem:[#allocation8 + $0x30] sm:$0xf]
    %v795 = vld [vmem:[#allocation8 + $0x34] sm:$0xf]
    %v796 = vld [vmem:[#allocation8 + $0x38] sm:$0xf]
    %v797 = vld [vmem:[#allocation8 + $0x3c] sm:$0xf]
    %v798 = vld [vmem:[#allocation5] sm:$0xff]
    %v799 = vld [vmem:[%s5] sm:$0xff]
    %vm800 = vcmask 64512
    %v802 = vsel %vm800, %v798, 0
    %804 = vmatprep.subr.mxu0 0.0
    %805 = vmatpush1.msra.mxu0 %v799
    %806 = vmatprep.subr.mxu0 0.0
    %807 = vmatpush1.msra.mxu0 0.0
    %808 = vmatprep.subr.mxu0 0.0
    %809 = vmatpush1.msra.mxu0 0.0
    %810 = vmatprep.subr.mxu0 0.0
    %811 = vmatpush1.msra.mxu0 0.0
    %812 = vmatprep.subr.mxu0 0.0
    %813 = vmatpush1.msra.mxu0 0.0
    %814 = vmatprep.subr.mxu0 0.0
    %815 = vmatpush1.msra.mxu0 0.0
    %816 = vmatprep.subr.mxu0 0.0
    %817 = vmatpush1.msra.mxu0 0.0
    %818 = vmatprep.subr.mxu0 0.0
    %819 = vmatpush1.msra.mxu0 0.0
    %820 = vmatprep.subr.mxu0 0.0
    %821 = vmatpush1.msra.mxu0 0.0
    %822 = vmatprep.subr.mxu0 0.0
    %823 = vmatpush1.msra.mxu0 0.0
    %824 = vmatprep.subr.mxu0 0.0
    %825 = vmatpush1.msra.mxu0 0.0
    %826 = vmatprep.subr.mxu0 0.0
    %827 = vmatpush1.msra.mxu0 0.0
    %828 = vmatprep.subr.mxu0 0.0
    %829 = vmatpush1.msra.mxu0 0.0
    %830 = vmatprep.subr.mxu0 0.0
    %831 = vmatpush1.msra.mxu0 0.0
    %832 = vmatprep.subr.mxu0 0.0
    %833 = vmatpush1.msra.mxu0 0.0
    %834 = vmatprep.subr.mxu0 0.0
    %835 = vmatpush1.msra.mxu0 0.0
    %836 = vmatprep.subr.mxu0 0.0
    %837 = vmatpush1.msra.mxu0 0.0
    %838 = vmatprep.subr.mxu0 0.0
    %839 = vmatpush1.msra.mxu0 0.0
    %840 = vmatprep.subr.mxu0 0.0
    %841 = vmatpush1.msra.mxu0 0.0
    %842 = vmatprep.subr.mxu0 0.0
    %843 = vmatpush1.msra.mxu0 0.0
    %844 = vmatprep.subr.mxu0 0.0
    %845 = vmatpush1.msra.mxu0 0.0
    %846 = vmatprep.subr.mxu0 0.0
    %847 = vmatpush1.msra.mxu0 0.0
    %848 = vmatprep.subr.mxu0 0.0
    %849 = vmatpush1.msra.mxu0 0.0
    %850 = vmatprep.subr.mxu0 0.0
    %851 = vmatpush1.msra.mxu0 0.0
    %852 = vmatprep.subr.mxu0 0.0
    %853 = vmatpush1.msra.mxu0 0.0
    %854 = vmatprep.subr.mxu0 0.0
    %855 = vmatpush1.msra.mxu0 0.0
    %856 = vmatprep.subr.mxu0 0.0
    %857 = vmatpush1.msra.mxu0 0.0
    %858 = vmatprep.subr.mxu0 0.0
    %859 = vmatpush1.msra.mxu0 0.0
    %860 = vmatprep.subr.mxu0 0.0
    %861 = vmatpush1.msra.mxu0 0.0
    %862 = vmatprep.subr.mxu0 0.0
    %863 = vmatpush1.msra.mxu0 0.0
    %864 = vmatprep.subr.mxu0 0.0
    %865 = vmatpush1.msra.mxu0 0.0
    %866 = vmatprep.subr.mxu0 0.0
    %867 = vmatpush1.msra.mxu0 0.0
    %868 = vmatprep.mubr.f32.mxu0 0.0
    %869 = vmatmul.mubr.f32.gmra.mrb[0].mxu0 %v802
    %v870 = vpop.f32.mrb[0].mxu0
    %v871 = vadd.f32 0.0, %v870
    %v872 = vpop.f32.mrb[0].mxu0
    %873 = vdwg.mxu0
    %v890 = vunpack.c.l.b16 %v782
    %v891 = vunpack.c.l.b16 %v783
    %v892 = vunpack.c.l.b16 %v784
    %v893 = vunpack.c.l.b16 %v785
    %v894 = vunpack.c.l.b16 %v786
    %v895 = vunpack.c.l.b16 %v787
    %v896 = vunpack.c.l.b16 %v788
    %v897 = vunpack.c.l.b16 %v789
    %v898 = vunpack.c.l.b16 %v790
    %v899 = vunpack.c.l.b16 %v791
    %v900 = vunpack.c.l.b16 %v792
    %v901 = vunpack.c.l.b16 %v793
    %v902 = vunpack.c.l.b16 %v794
    %v903 = vunpack.c.l.b16 %v795
    %v904 = vunpack.c.l.b16 %v796
    %v905 = vunpack.c.l.b16 %v797
    %v906 = vpack.c.b16 %v891, %v890
    %v907 = vpack.c.b16 %v893, %v892
    %v908 = vpack.c.b16 %v895, %v894
    %v909 = vpack.c.b16 %v897, %v896
    %v910 = vpack.c.b16 %v899, %v898
    %v911 = vpack.c.b16 %v901, %v900
    %v912 = vpack.c.b16 %v903, %v902
    %v913 = vpack.c.b16 %v905, %v904
    %922 = vmatprep.subr.bf16.mxu0 0
    %923 = vmatpush1.bf16.msra.mxu0 %v906
    %924 = vmatprep.subr.bf16.mxu0 0
    %925 = vmatpush1.bf16.msra.mxu0 %v907
    %926 = vmatprep.subr.bf16.mxu0 0
    %927 = vmatpush1.bf16.msra.mxu0 %v908
    %928 = vmatprep.subr.bf16.mxu0 0
    %929 = vmatpush1.bf16.msra.mxu0 %v909
    %930 = vmatprep.subr.bf16.mxu0 0
    %931 = vmatpush1.bf16.msra.mxu0 %v910
    %932 = vmatprep.subr.bf16.mxu0 0
    %933 = vmatpush1.bf16.msra.mxu0 %v911
    %934 = vmatprep.subr.bf16.mxu0 0
    %935 = vmatpush1.bf16.msra.mxu0 %v912
    %936 = vmatprep.subr.bf16.mxu0 0
    %937 = vmatpush1.bf16.msra.mxu0 %v913
    %938 = vmatprep.subr.bf16.mxu0 0
    %939 = vmatpush1.bf16.msra.mxu0 0
    %940 = vmatprep.subr.bf16.mxu0 0
    %941 = vmatpush1.bf16.msra.mxu0 0
    %942 = vmatprep.subr.bf16.mxu0 0
    %943 = vmatpush1.bf16.msra.mxu0 0
    %944 = vmatprep.subr.bf16.mxu0 0
    %945 = vmatpush1.bf16.msra.mxu0 0
    %946 = vmatprep.subr.bf16.mxu0 0
    %947 = vmatpush1.bf16.msra.mxu0 0
    %948 = vmatprep.subr.bf16.mxu0 0
    %949 = vmatpush1.bf16.msra.mxu0 0
    %950 = vmatprep.subr.bf16.mxu0 0
    %951 = vmatpush1.bf16.msra.mxu0 0
    %952 = vmatprep.subr.bf16.mxu0 0
    %953 = vmatpush1.bf16.msra.mxu0 0
    %954 = vmatprep.mubr.bf16.mxu0 0
    %955 = vmatmul.mubr.bf16.gmra.mrb[0].mxu0 %v781
    %v956 = vpop.f32.mrb[0].mxu0
    %v957 = vadd.f32 %v871, %v956
    %v958 = vpop.f32.mrb[0].mxu0
    %v959 = vpop.f32.mrb[0].mxu0
    %v960 = vpop.f32.mrb[0].mxu0
    %961 = vdwg.mxu0
    %v962 = vld [vmem:[%s6] sm:$0x1]
    %v964 = vlaneseq
    %v965 = vshrl.u32 %v964, 7
    %v966 = vsub.s32 0, %v965
    %v967 = vrot.slane %v962, %v966
    %v969 = vadd.f32 %v957, %v967
    %v970 = vmax.f32 %v969, 0.0
    %v971 = vld [vmem:[%s7] sm:$0x1]
    %v973 = vlaneseq
    %v974 = vshrl.u32 %v973, 7
    %v975 = vsub.s32 0, %v974
    %v976 = vrot.slane %v971, %v975
    %v978 = vmul.f32 %v970, %v976
    %979 = vadd.xlane.f32.xlu0 %v978
    %v980 = vpop.xlane.xlu0 %979
    %s981 = sld [smem:[#allocation2]]
    %v982 = vstv %s981
    %v983 = vadd.f32 %v980, %v982
    %vm984 = vcmask 7168
    %985 = vst.msk [vmem:[%s9] sm:$0xff] %vm984, %v983
    // Predicated region
    $region54: #{tpu_custom_call.1} parent=1 // pred_check
      _
    $region55: #{tpu_custom_call.1} parent=1 // pred_check_branch
      %987 = sbr.rel (0) target = $region57
    $region56: #{tpu_custom_call.1} parent=1 // pred_region
      _
    $region57: #{tpu_custom_call.1} parent=1 // pred_fallthru
      _
    // Predicated region
    $region58: #{tpu_custom_call.1} parent=1 // pred_check
      _
    $region59: #{tpu_custom_call.1} parent=1 // pred_check_branch
      %989 = sbr.rel (0) target = $region61
    $region60: #{tpu_custom_call.1} parent=1 // pred_region
      _
    $region61: #{tpu_custom_call.1} parent=1 // pred_fallthru
      _
    %990 = vsyncpa [#allocation4], 1
    %991 = vsyncpa [#allocation6], 1
    %992 = vsyncpa [#allocation9], 1

</llo_original>
